<compile_context>
chip_gen: v6e
topology: v6e:2x2x1
jax: 0.10.0
libtpu: 0.0.40
codegen_flags: <defaults>
</compile_context>

<pallas_src>
import functools

import jax
import jax.numpy as jnp
from jax.experimental import pallas as pl
from jax.experimental.pallas import tpu as pltpu


# --------------------------------------------------------------------------- #
# Kernel bodies
# --------------------------------------------------------------------------- #
def _row_focal_loss(logits_f32, tgt, alpha_row, gamma):
    """Per-row focal loss column (TN, 1) from a (TN, C) logits tile."""
    tn, c = logits_f32.shape
    cls_ids = jax.lax.broadcasted_iota(jnp.int32, (tn, c), 1)
    mask = (cls_ids == tgt).astype(jnp.float32)                       # one-hot

    # log-softmax gathered at the target class (max-shifted, reuse `shifted`)
    m = jnp.max(logits_f32, axis=1, keepdims=True)                    # (TN, 1)
    shifted = logits_f32 - m                                          # (TN, C)
    lse = jnp.log(jnp.sum(jnp.exp(shifted), axis=1, keepdims=True))   # (TN, 1)
    log_p = jnp.sum(shifted * mask, axis=1, keepdims=True) - lse      # (TN, 1)
    probs = jnp.exp(log_p)                                            # (TN, 1)

    # alpha[target] as a masked sum over the class axis
    alpha_t = jnp.sum(alpha_row * mask, axis=1, keepdims=True)        # (TN, 1)

    one_minus_p = 1.0 - probs
    g = float(gamma)
    if g == int(g) and g >= 1.0:
        focal = one_minus_p                     # gamma=2 -> one extra multiply
        for _ in range(int(g) - 1):
            focal = focal * one_minus_p
    elif g == 0.0:
        focal = jnp.ones_like(one_minus_p)
    else:
        # exp(gamma*log(1-p)); clamp gives the correct p -> 1 limit
        focal = jnp.exp(g * jnp.log(jnp.maximum(one_minus_p, 1e-30)))

    return -alpha_t * focal * log_p


def _valid_rows(tn, tile_n, n_rows):
    """(TN, 1) bool mask: global row index < n_rows (handles ragged last tile)."""
    start = pl.program_id(0) * tile_n
    rows = jax.lax.broadcasted_iota(jnp.int32, (tn, 1), 0) + start
    return rows < n_rows


def _focal_rows_kernel(pred_ref, tgt_ref, alpha_ref, loss_ref, *,
                       gamma, tile_n, n_rows):
    # reduction='none': per-row loss, (TILE_N, 1) block of the (N, 1) output.
    logits = pred_ref[...].astype(jnp.float32)
    loss = _row_focal_loss(logits, tgt_ref[...], alpha_ref[...], gamma)
    valid = _valid_rows(logits.shape[0], tile_n, n_rows)
    loss_ref[...] = jnp.where(valid, loss, 0.0)


def _focal_sum_kernel(pred_ref, tgt_ref, alpha_ref, psum_ref, *,
                      gamma, tile_n, n_rows):
    # reduction='mean'/'sum': emit one partial sum per tile as a lane/sublane
    # aligned (1, 8, 128) block (value broadcast; wrapper reads [:, 0, 0]).
    logits = pred_ref[...].astype(jnp.float32)
    loss = _row_focal_loss(logits, tgt_ref[...], alpha_ref[...], gamma)
    valid = _valid_rows(logits.shape[0], tile_n, n_rows)
    loss = jnp.where(valid, loss, 0.0)
    psum_ref[...] = jnp.zeros(psum_ref.shape, jnp.float32) + jnp.sum(loss)


# --------------------------------------------------------------------------- #
# Wrapper
# --------------------------------------------------------------------------- #
def _vmem_limit_bytes():
    try:
        cap = pltpu.get_tpu_info().vmem_capacity_bytes
    except Exception:                       # pragma: no cover - fallback
        cap = 64 * 1024 * 1024
    # v5e/v6e have 128 MiB physical VMEM -> 64 MiB scoped limit is safe and
    # amortizes per-step overhead; v7x has only 64 MiB -> stay at 32 MiB.
    return 64 * 1024 * 1024 if cap >= 100 * 1024 * 1024 else 32 * 1024 * 1024


def _choose_tile_n(n, c, itemsize, vmem_limit, per_row_output):
    """Largest multiple-of-8 row tile whose double-buffered, lane-padded VMEM
    footprint fits in ~half the scoped VMEM limit."""
    c_pad = pl.cdiv(c, 128) * 128
    row_bytes = c_pad * itemsize            # logits block (lane-padded)
    row_bytes += 128 * 4                    # (TN, 1) int32 targets (lane-padded)
    if per_row_output:
        row_bytes += 128 * 4                # (TN, 1) f32 per-row loss output
    per_row = 2 * row_bytes                 # double-buffered pipeline
    budget = vmem_limit // 2                # headroom for compiler temporaries

    tile_n = max(8, (budget // per_row) // 8 * 8)
    tile_n = min(tile_n, pl.cdiv(n, 8) * 8)
    # Prefer >= 2 tiles when there is enough work (v7x megacore + overlap).
    if pl.cdiv(n, tile_n) == 1 and n >= 4096:
        tile_n = pl.cdiv(pl.cdiv(n, 2), 8) * 8
    return int(tile_n)


def multi_ce_focal_loss(predict, target, alpha=None, *, gamma=2.0,
                        reduction="mean", tile_n=None):
    """predict: (N, C) float (f32/bf16); target: (N,) int; alpha: (C, 1) float."""
    n, c = predict.shape
    itemsize = jnp.dtype(predict.dtype).itemsize
    if alpha is None:
        alpha = jnp.ones((c, 1), jnp.float32)

    tgt = target.reshape(n, 1).astype(jnp.int32)
    alpha_row = jnp.asarray(alpha, jnp.float32).reshape(1, c)

    vmem_limit = _vmem_limit_bytes()
    per_row_out = reduction not in ("mean", "sum")
    if tile_n is None:
        tile_n = _choose_tile_n(n, c, itemsize, vmem_limit, per_row_out)
    tile_n = max(8, (int(tile_n) // 8) * 8)
    num_tiles = int(pl.cdiv(n, tile_n))

    in_specs = [
        pl.BlockSpec((tile_n, c), lambda i: (i, 0)),    # logits tile (ragged tail ok)
        pl.BlockSpec((tile_n, 1), lambda i: (i, 0)),    # target tile
        pl.BlockSpec((1, c), lambda i: (0, 0)),         # alpha (replicated)
    ]
    compiler_params = pltpu.CompilerParams(
        dimension_semantics=("parallel",),
        vmem_limit_bytes=vmem_limit,
    )
    in_bytes = n * c * itemsize + n * 4 + c * 4
    flops = 8 * n * c + 12 * n
    transcendentals = n * c + 3 * n            # one exp per logit + O(N) row ops

    if per_row_out:
        kernel = functools.partial(_focal_rows_kernel, gamma=float(gamma),
                                   tile_n=tile_n, n_rows=n)
        return pl.pallas_call(
            kernel,
            out_shape=jax.ShapeDtypeStruct((n, 1), jnp.float32),
            grid=(num_tiles,),
            in_specs=in_specs,
            out_specs=pl.BlockSpec((tile_n, 1), lambda i: (i, 0)),
            compiler_params=compiler_params,
            cost_estimate=pl.CostEstimate(
                flops=flops, transcendentals=transcendentals,
                bytes_accessed=in_bytes + n * 4),
        )(predict, tgt, alpha_row)              # (N, 1), matches PyTorch 'none'

    kernel = functools.partial(_focal_sum_kernel, gamma=float(gamma),
                               tile_n=tile_n, n_rows=n)
    psum = pl.pallas_call(
        kernel,
        out_shape=jax.ShapeDtypeStruct((num_tiles, 8, 128), jnp.float32),
        grid=(num_tiles,),
        in_specs=in_specs,
        out_specs=pl.BlockSpec((1, 8, 128), lambda i: (i, 0, 0)),
        compiler_params=compiler_params,
        cost_estimate=pl.CostEstimate(
            flops=flops, transcendentals=transcendentals,
            bytes_accessed=in_bytes + num_tiles * 8 * 128 * 4),
    )(predict, tgt, alpha_row)

    total = jnp.sum(psum[:, 0, 0])
    if reduction == "mean":
        return total / n
    return total                                 # 'sum'


# --------------------------------------------------------------------------- #
# Pure-JAX reference (mirrors the PyTorch forward)
# --------------------------------------------------------------------------- #
def _reference(predict, target, alpha, gamma=2.0):
    pt = jax.nn.softmax(predict.astype(jnp.float32), axis=1)
    mask = jax.nn.one_hot(target, predict.shape[1], dtype=jnp.float32)
    probs = jnp.sum(pt * mask, axis=1, keepdims=True)
    alpha_n = alpha[target]                                  # (N, 1)
    loss = -alpha_n * jnp.power(1.0 - probs, gamma) * jnp.log(probs)
    return jnp.mean(loss)


if __name__ == "__main__":
    class_num = 4
    batch = 8
    gamma = 2.0

    key = jax.random.PRNGKey(0)
    k1, k2 = jax.random.split(key)
    predict = jax.random.normal(k1, (batch, class_num), dtype=jnp.float32)
    target = jax.random.randint(k2, (batch,), 0, class_num, dtype=jnp.int32)
    alpha = jnp.ones((class_num, 1), dtype=jnp.float32)      # module default

    loss = jax.block_until_ready(
        multi_ce_focal_loss(predict, target, alpha, gamma=gamma, reduction="mean"))
    ref = _reference(predict, target, alpha, gamma=gamma)
    assert jnp.allclose(loss, ref, atol=1e-5, rtol=1e-5), (loss, ref)

    # reduction='none' and 'sum'
    loss_none = jax.block_until_ready(
        multi_ce_focal_loss(predict, target, alpha, gamma=gamma, reduction="none"))
    loss_sum = jax.block_until_ready(
        multi_ce_focal_loss(predict, target, alpha, gamma=gamma, reduction="sum"))
    assert loss_none.shape == (batch, 1)
    assert jnp.allclose(jnp.mean(loss_none), ref, atol=1e-5, rtol=1e-5)
    assert jnp.allclose(loss_sum, ref * batch, atol=1e-4, rtol=1e-5)

    # exercise the ragged-tail / in-kernel masking path (N not a tile multiple)
    batch2 = 13
    k3, k4 = jax.random.split(k2)
    predict2 = jax.random.normal(k3, (batch2, class_num), dtype=jnp.float32)
    target2 = jax.random.randint(k4, (batch2,), 0, class_num, dtype=jnp.int32)
    loss2 = jax.block_until_ready(
        multi_ce_focal_loss(predict2, target2, alpha, gamma=gamma, reduction="mean"))
    ref2 = _reference(predict2, target2, alpha, gamma=gamma)
    assert jnp.allclose(loss2, ref2, atol=1e-5, rtol=1e-5), (loss2, ref2)

    print("KERNEL_OK")
</pallas_src>

<mosaic_0001>
module attributes {stable_mosaic.version = 11 : i64} {
  func.func @_focal_sum_kernel(%arg0: i32, %arg1: memref<8x4xf32, #tpu.memory_space<vmem>>, %arg2: memref<8x1xi32, #tpu.memory_space<vmem>>, %arg3: memref<1x4xf32, #tpu.memory_space<vmem>>, %arg4: memref<1x8x128xf32, #tpu.memory_space<vmem>>) attributes {dimension_semantics = [#tpu.dimension_semantics<parallel>], iteration_bounds = array<i64: 1>, scalar_prefetch = 0 : i64, scratch_operands = 0 : i64, tpu.core_type = #tpu.core_type<tc>, window_params = [{transform_indices = @transform_0, window_bounds = array<i64: 8, 4>}, {transform_indices = @transform_1, window_bounds = array<i64: 8, 1>}, {pipeline_mode = #tpu.pipeline_mode<synchronous>, transform_indices = @transform_2, window_bounds = array<i64: 1, 4>}, {transform_indices = @transform_3, window_bounds = array<i64: 1, 8, 128>}]} {
    %c0 = arith.constant 0 : index
    %c0_0 = arith.constant 0 : index
    %0 = vector.load %arg1[%c0, %c0_0] : memref<8x4xf32, #tpu.memory_space<vmem>>, vector<8x4xf32>
    %c0_1 = arith.constant 0 : index
    %c0_2 = arith.constant 0 : index
    %1 = vector.load %arg2[%c0_1, %c0_2] : memref<8x1xi32, #tpu.memory_space<vmem>>, vector<8x1xi32>
    %c0_3 = arith.constant 0 : index
    %c0_4 = arith.constant 0 : index
    %2 = vector.load %arg3[%c0_3, %c0_4] : memref<1x4xf32, #tpu.memory_space<vmem>>, vector<1x4xf32>
    %3 = tpu.iota {dimensions = array<i32: 1>} : vector<8x4xi32>
    %4 = vector.broadcast %1 : vector<8x1xi32> to vector<8x4xi32>
    %5 = arith.cmpi eq, %3, %4 : vector<8x4xi32>
    %6 = arith.extui %5 : vector<8x4xi1> to vector<8x4xi32>
    %7 = arith.sitofp %6 : vector<8x4xi32> to vector<8x4xf32>
    %cst = arith.constant dense<0xFF800000> : vector<8xf32>
    %8 = vector.multi_reduction <maximumf>, %0, %cst [1] : vector<8x4xf32> to vector<8xf32>
    %9 = vector.shape_cast %8 : vector<8xf32> to vector<8x1xf32>
    %10 = vector.broadcast %9 : vector<8x1xf32> to vector<8x4xf32>
    %11 = arith.subf %0, %10 : vector<8x4xf32>
    %12 = math.exp %11 : vector<8x4xf32>
    %cst_5 = arith.constant dense<0.000000e+00> : vector<8xf32>
    %13 = vector.multi_reduction <add>, %12, %cst_5 [1] : vector<8x4xf32> to vector<8xf32>
    %14 = vector.shape_cast %13 : vector<8xf32> to vector<8x1xf32>
    %15 = math.log %14 : vector<8x1xf32>
    %16 = arith.mulf %11, %7 : vector<8x4xf32>
    %cst_6 = arith.constant dense<0.000000e+00> : vector<8xf32>
    %17 = vector.multi_reduction <add>, %16, %cst_6 [1] : vector<8x4xf32> to vector<8xf32>
    %18 = vector.shape_cast %17 : vector<8xf32> to vector<8x1xf32>
    %19 = arith.subf %18, %15 : vector<8x1xf32>
    %20 = math.exp %19 : vector<8x1xf32>
    %21 = vector.broadcast %2 : vector<1x4xf32> to vector<8x4xf32>
    %22 = arith.mulf %21, %7 : vector<8x4xf32>
    %cst_7 = arith.constant dense<0.000000e+00> : vector<8xf32>
    %23 = vector.multi_reduction <add>, %22, %cst_7 [1] : vector<8x4xf32> to vector<8xf32>
    %24 = vector.shape_cast %23 : vector<8xf32> to vector<8x1xf32>
    %cst_8 = arith.constant 1.000000e+00 : f32
    %25 = vector.broadcast %cst_8 : f32 to vector<8x1xf32>
    %26 = arith.subf %25, %20 : vector<8x1xf32>
    %27 = arith.mulf %26, %26 : vector<8x1xf32>
    %cst_9 = arith.constant 0.000000e+00 : f32
    %28 = vector.broadcast %cst_9 : f32 to vector<8x1xf32>
    %29 = arith.subf %28, %24 : vector<8x1xf32>
    %30 = arith.mulf %29, %27 : vector<8x1xf32>
    %31 = arith.mulf %30, %19 : vector<8x1xf32>
    %c8_i32 = arith.constant 8 : i32
    %32 = arith.muli %arg0, %c8_i32 : i32
    %33 = tpu.iota {dimensions = array<i32: 0>} : vector<8x1xi32>
    %34 = vector.broadcast %32 : i32 to vector<8x1xi32>
    %35 = arith.addi %33, %34 : vector<8x1xi32>
    %c8_i32_10 = arith.constant 8 : i32
    %36 = vector.broadcast %c8_i32_10 : i32 to vector<8x1xi32>
    %37 = arith.cmpi slt, %35, %36 : vector<8x1xi32>
    %cst_11 = arith.constant 0.000000e+00 : f32
    %38 = vector.broadcast %cst_11 : f32 to vector<8x1xf32>
    %39 = arith.select %37, %31, %38 : vector<8x1xi1>, vector<8x1xf32>
    %cst_12 = arith.constant 0.000000e+00 : f32
    %40 = vector.broadcast %cst_12 : f32 to vector<1x8x128xf32>
    %41 = vector.shape_cast %39 : vector<8x1xf32> to vector<1x8x1xf32>
    %cst_13 = arith.constant dense<0.000000e+00> : vector<1xf32>
    %42 = vector.multi_reduction <add>, %41, %cst_13 [1, 2] : vector<1x8x1xf32> to vector<1xf32>
    %43 = vector.shape_cast %42 : vector<1xf32> to vector<1x1x1xf32>
    %44 = vector.extract %43[0, 0, 0] : f32 from vector<1x1x1xf32>
    %45 = vector.broadcast %44 : f32 to vector<1x8x128xf32>
    %46 = arith.addf %40, %45 : vector<1x8x128xf32>
    %c0_14 = arith.constant 0 : index
    %c0_15 = arith.constant 0 : index
    %c0_16 = arith.constant 0 : index
    %47 = vector.load %arg4[%c0_14, %c0_15, %c0_16] : memref<1x8x128xf32, #tpu.memory_space<vmem>>, vector<1x8x128xf32>
    tpu.vector_store %arg4[%c0_14, %c0_15, %c0_16], %46 {strides = array<i32>} : memref<1x8x128xf32, #tpu.memory_space<vmem>>, vector<1x8x128xf32>,
    return
  }
  func.func @transform_0(%arg0: i32) -> (i32, i32) {
    %c0_i32 = arith.constant 0 : i32
    %c0_i32_0 = arith.constant 0 : i32
    return %arg0, %c0_i32 : i32, i32
  }
  func.func @transform_1(%arg0: i32) -> (i32, i32) {
    %c0_i32 = arith.constant 0 : i32
    %c0_i32_0 = arith.constant 0 : i32
    return %arg0, %c0_i32 : i32, i32
  }
  func.func @transform_2(%arg0: i32) -> (i32, i32) {
    %c0_i32 = arith.constant 0 : i32
    %c0_i32_0 = arith.constant 0 : i32
    %c0_i32_1 = arith.constant 0 : i32
    return %c0_i32, %c0_i32_0 : i32, i32
  }
  func.func @transform_3(%arg0: i32) -> (i32, i32, i32) {
    %c0_i32 = arith.constant 0 : i32
    %c0_i32_0 = arith.constant 0 : i32
    %c0_i32_1 = arith.constant 0 : i32
    return %arg0, %c0_i32, %c0_i32_0 : i32, i32, i32
  }
}

</mosaic_0001>

<llo_original>
// kernel: tpu_custom_call.1
$region0: #{tpu_custom_call.1}
  #allocation0 [shape = 'u32[]', space=smem, size = 0x4, offset = 0x4, fixed_abs, tag = 'smem constant byte address 0x4 - core index']
  #allocation1 [shape = 'u32[144,128]{1,0:T(1,128)}', space=vmem, size = 0x12000, scoped, tag = 'internal scratch']
  %s0 = inlined_call_operand.vmem [shape: f32[8,4], index: 0, kind: input, shape index: {}]
  %s1 = inlined_call_operand.vmem [shape: s32[8,1], index: 1, kind: input, shape index: {}]
  %s2 = inlined_call_operand.vmem [shape: f32[1,4], index: 2, kind: input, shape index: {}]
  %s3 = inlined_call_operand.hbm [shape: f32[1,8,128], index: 3, kind: output, shape index: {}]
  %s4 = sld [smem:[#allocation0]]
  $region22: #{tpu_custom_call.1} parent=0
    _
  %s6 = ssub.s32 1, %s4
  %s7 = scalar_select 0, %s6, %s4
  $region1: #{tpu_custom_call.1} parent=0
    #allocation2 [shape = 'u8[4096]{0}', space=vmem, size = 0x1000, scoped, tag = 'output window, operand 0, single buffered']
    #allocation3 [shape = 's32[1]{0}', space=sflag, size = 0x4, scoped, tag = 'scoped memory for tpu_custom_call.1']
    %8 = vsyncpa [#allocation3], 0
    // Predicated region
    $region2: #{tpu_custom_call.1} parent=1 // pred_check
      _
    $region3: #{tpu_custom_call.1} parent=1 // pred_check_branch
      %10 = sbr.rel (0) target = $region5
    $region4: #{tpu_custom_call.1} parent=1 // pred_region
      _
    $region5: #{tpu_custom_call.1} parent=1 // pred_fallthru
      _
    // Predicated region
    $region6: #{tpu_custom_call.1} parent=1 // pred_check
      _
    $region7: #{tpu_custom_call.1} parent=1 // pred_check_branch
      %12 = sbr.rel (0) target = $region9
    $region8: #{tpu_custom_call.1} parent=1 // pred_region
      _
    $region9: #{tpu_custom_call.1} parent=1 // pred_fallthru
      _
    // Predicated region
    $region10: #{tpu_custom_call.1} parent=1 // pred_check
      _
    $region11: #{tpu_custom_call.1} parent=1 // pred_check_branch
      %14 = sbr.rel (0) target = $region13
    $region12: #{tpu_custom_call.1} parent=1 // pred_region
      _
    $region13: #{tpu_custom_call.1} parent=1 // pred_fallthru
      _
    %v15 = vld [vmem:[%s0] sm:$0xff]
    %v16 = vld [vmem:[%s1] sm:$0xff]
    %v17 = vld [vmem:[%s2] sm:$0x1]
    %v18 = vlaneseq
    %v19 = vand.u32 %v18, 127
    %20 = vset.pattern.permute.xlu0 0
    %21 = vperm.xlu0 %20, %v16
    %v22 = vpop.permute.xlu0 %21
    %vm23 = vcmp.eq.s32.totalorder %v19, %v22
    %v24 = vsel %vm23, 1, 0
    %v25 = vcvt.s32.f32 %v24
    %vm26 = vcmask 31744
    %v27 = vsel %vm26, %v15, -inf
    %28 = vmax.xlane.f32.xlu0 %v27
    %v29 = vpop.xlane.xlu0 %28
    %v30 = vsub.f32 %v15, %v29
    %v31 = vmul.f32 %v30, 1.442695
    %v32 = vpow.pop %v31
    %v33 = vsel %vm26, %v32, 0.0
    %34 = vadd.xlane.f32.xlu0 %v33
    %v35 = vpop.xlane.xlu0 %34
    %v36 = vlog2.pop %v35
    %v37 = vmul.f32 %v36, 0.6931472
    %v38 = vmul.f32 %v30, %v25
    %v39 = vsel %vm26, %v38, 0.0
    %40 = vadd.xlane.f32.xlu0 %v39
    %v41 = vpop.xlane.xlu0 %40
    %v42 = vsub.f32 %v41, %v37
    %v43 = vmul.f32 %v42, 1.442695
    %v44 = vpow.pop %v43
    %v46 = vlaneseq
    %v47 = vshrl.u32 %v46, 7
    %v48 = vsub.s32 0, %v47
    %v49 = vrot.slane %v17, %v48
    %v51 = vmul.f32 %v49, %v25
    %v52 = vsel %vm26, %v51, 0.0
    %53 = vadd.xlane.f32.xlu0 %v52
    %v54 = vpop.xlane.xlu0 %53
    %v55 = vsub.f32 1.0, %v44
    %v56 = vmul.f32 %v55, %v55
    %v57 = vsub.f32 0.0, %v54
    %v58 = vmul.f32 %v57, %v56
    %v59 = vmul.f32 %v58, %v42
    %s60 = smul.u32 0, 8
    %v61 = vlaneseq
    %v62 = vshrl.u32 %v61, 7
    %v63 = vstv %s60
    %v64 = vadd.s32 %v62, %v63
    %vm65 = vcmp.lt.s32.totalorder %v64, 8
    %v66 = vsel %vm65, %v59, 0.0
    %vm67 = vcmask 7168
    %v68 = vsel %vm67, %v66, 0.0
    %69 = vadd.xlane.f32.xlu0 %v68
    %v70 = vpop.xlane.xlu0 %69
    %v71 = vrot.slane %v70, 4
    %v72 = vadd.f32 %v70, %v71
    %v73 = vrot.slane %v72, 2
    %v74 = vadd.f32 %v72, %v73
    %v75 = vrot.slane %v74, 1
    %v76 = vadd.f32 %v74, %v75
    %s77 = vtos %v76
    %v78 = vstv %s77
    %v79 = vadd.f32 %v78, 0.0
    %80 = vst [vmem:[#allocation2] sm:$0xff] %v79
    // Predicated region
    $region14: #{tpu_custom_call.1} parent=1 // pred_check
      _
    $region15: #{tpu_custom_call.1} parent=1 // pred_check_branch
      %82 = sbr.rel (0) target = $region17
    $region16: #{tpu_custom_call.1} parent=1 // pred_region
      %s84 = ssub.s32 128, 128
      %85 = vsyncadd [#allocation3], %s84
      %s87 = sshll.u32 [#allocation2], 4
      %s88 = int_to_ptr.vmem [resolvable:$true] %s87
      %90 = dma.vmem_to_hbm [thread:$0]  %s88, 128, %s3, [#allocation3]
    $region17: #{tpu_custom_call.1} parent=1 // pred_fallthru
      _
    // Predicated region
    $region18: #{tpu_custom_call.1} parent=1 // pred_check
      _
    $region19: #{tpu_custom_call.1} parent=1 // pred_check_branch
      %92 = sbr.rel (0) target = $region21
    $region20: #{tpu_custom_call.1} parent=1 // pred_region
      %93 = dma.done [#allocation3], 128
    $region21: #{tpu_custom_call.1} parent=1 // pred_fallthru
      _
    %94 = vsyncpa [#allocation3], 1

</llo_original>
